<compile_context>
chip_gen: v7x
topology: tpu7x:2x2x1
jax: 0.10.0
libtpu: 0.0.40
codegen_flags: <defaults>
</compile_context>

<pallas_src>
import functools

import jax
import jax.numpy as jnp
from jax.experimental import pallas as pl
from jax.experimental.pallas import tpu as pltpu


def _round_up(x, m):
    return (x + m - 1) // m * m


def _mtask_kernel(layer_size, *refs):
    """Shared-trunk MLP + fused task heads for one batch tile.

    refs = (x, w_0, b_0, ..., w_{L-1}, b_{L-1}, w_head, b_head, out)
    """
    x_ref = refs[0]
    out_ref = refs[-1]
    wh_ref, bh_ref = refs[-3], refs[-2]

    h = x_ref[...].astype(jnp.float32)
    # Shared trunk: Linear + ReLU. bf16 MXU inputs, f32 accumulation.
    for l in range(layer_size):
        w_ref = refs[1 + 2 * l]
        b_ref = refs[2 + 2 * l]
        h = (
            jnp.dot(h.astype(jnp.bfloat16), w_ref[...],
                    preferred_element_type=jnp.float32)
            + b_ref[...]
        )
        h = jnp.maximum(h, 0.0)
    # All task heads fused into one lane-dense matmul -> [tile_b, N_pad].
    out_ref[...] = (
        jnp.dot(h.astype(jnp.bfloat16), wh_ref[...],
                preferred_element_type=jnp.float32)
        + bh_ref[...]
    )


def mtask_forward(x, trunk_params, head_w, head_b, *, num_tasks):
    """MT_DNN forward. Returns a stacked [B, num_tasks, 2] f32 array."""
    layer_size = len(trunk_params)
    B, emb_dim = x.shape
    N = num_tasks * 2
    N_pad = _round_up(N, 128)           # lane-dense output slab

    # Batch tiling: multiples of 8 sublanes; 256 suits the v6e 256x256 MXU and is
    # fine on v5e/v7x. Small batches collapse to a single grid step.
    B8 = _round_up(max(B, 1), 8)
    tile_b = min(B8, 256)
    B_pad = _round_up(B8, tile_b)
    grid = (B_pad // tile_b,)

    x_f32 = x.astype(jnp.float32)
    if B_pad != B:
        x_f32 = jnp.pad(x_f32, ((0, B_pad - B), (0, 0)))

    # bf16 weights, f32 biases; zero-pad the fused head to N_pad columns.
    trunk_w = [w.astype(jnp.bfloat16) for (w, _) in trunk_params]
    trunk_b = [b.astype(jnp.float32).reshape(1, emb_dim) for (_, b) in trunk_params]
    hw = head_w.astype(jnp.bfloat16)
    hb = head_b.astype(jnp.float32).reshape(1, -1)
    if N_pad != N:
        hw = jnp.pad(hw, ((0, 0), (0, N_pad - N)))
        hb = jnp.pad(hb, ((0, 0), (0, N_pad - N)))

    flat_inputs = [x_f32]
    for w, b in zip(trunk_w, trunk_b):
        flat_inputs.extend([w, b])
    flat_inputs.extend([hw, hb])

    # Specs: x / out stream over the batch grid; weights stay VMEM-resident.
    def resident_spec(a):
        return pl.BlockSpec(a.shape, lambda i: (0,) * a.ndim)

    in_specs = [pl.BlockSpec((tile_b, emb_dim), lambda i: (i, 0))]
    for a in flat_inputs[1:]:
        in_specs.append(resident_spec(a))
    out_specs = pl.BlockSpec((tile_b, N_pad), lambda i: (i, 0))
    out_shape = jax.ShapeDtypeStruct((B_pad, N_pad), jnp.float32)

    # Explicit VMEM budget: resident weights + double-buffered x/out tiles
    # + activation working set, with margin; clamped under v7x's 64 MiB.
    weight_bytes = sum(int(a.size) * a.dtype.itemsize for a in flat_inputs[1:])
    io_bytes = 2 * (tile_b * emb_dim * 4 + tile_b * N_pad * 4)
    act_bytes = 4 * tile_b * max(emb_dim, N_pad) * 4
    vmem_limit = int(min(64 * 1024 * 1024,
                         max(2 * 1024 * 1024,
                             2 * (weight_bytes + io_bytes + act_bytes))))

    kernel = functools.partial(_mtask_kernel, layer_size)
    out = pl.pallas_call(
        kernel,
        out_shape=out_shape,
        grid=grid,
        in_specs=in_specs,
        out_specs=out_specs,
        compiler_params=pltpu.CompilerParams(
            dimension_semantics=("parallel",),
            vmem_limit_bytes=vmem_limit,
        ),
    )(*flat_inputs)

    # Slice away batch / lane padding and expose [B, num_tasks, 2].
    return out[:B, :N].reshape(B, num_tasks, 2)


def mtask_forward_list(x, trunk_params, head_w, head_b, *, num_tasks):
    """PyTorch-API parity: list of num_tasks [B, 2] predictions."""
    stacked = mtask_forward(x, trunk_params, head_w, head_b, num_tasks=num_tasks)
    return [stacked[:, t, :] for t in range(num_tasks)]


def init_params(key, emb_dim, layer_size, num_tasks):
    """Deterministic init mimicking nn.Linear default (uniform +-1/sqrt(fan_in)).

    Trunk/head weights are stored in bf16 (MXU-native); biases stay f32.
    """
    trunk = []
    bound = 1.0 / float(jnp.sqrt(jnp.float32(emb_dim)))
    for _ in range(layer_size):
        key, kw, kb = jax.random.split(key, 3)
        w = jax.random.uniform(kw, (emb_dim, emb_dim), jnp.float32, -bound, bound)
        b = jax.random.uniform(kb, (1, emb_dim), jnp.float32, -bound, bound)
        trunk.append((w.astype(jnp.bfloat16), b))
    key, kw, kb = jax.random.split(key, 3)
    head_w = jax.random.uniform(
        kw, (emb_dim, num_tasks * 2), jnp.float32, -bound, bound
    ).astype(jnp.bfloat16)
    head_b = jax.random.uniform(kb, (1, num_tasks * 2), jnp.float32, -bound, bound)
    return trunk, head_w, head_b


def reference_forward(x, trunk_params, head_w, head_b, num_tasks):
    """Pure-JAX reference mirroring the kernel math (bf16 inputs, f32 accumulate)."""
    h = x.astype(jnp.float32)
    for w, b in trunk_params:
        h = jnp.dot(h.astype(jnp.bfloat16), w.astype(jnp.bfloat16),
                    preferred_element_type=jnp.float32) + b.astype(jnp.float32)
        h = jnp.maximum(h, 0.0)
    out = jnp.dot(h.astype(jnp.bfloat16), head_w.astype(jnp.bfloat16),
                  preferred_element_type=jnp.float32) + head_b.astype(jnp.float32)
    return out.reshape(x.shape[0], num_tasks, 2)


if __name__ == "__main__":
    # Small, deterministic config (args.emb_dim, args.layer_size, args.num_tasks).
    batch = 8
    emb_dim = 32
    layer_size = 2
    num_tasks = 4

    key = jax.random.PRNGKey(0)
    key, kx = jax.random.split(key)
    x = jax.random.normal(kx, (batch, emb_dim), jnp.float32)

    trunk, head_w, head_b = init_params(key, emb_dim, layer_size, num_tasks)

    stacked = mtask_forward(x, trunk, head_w, head_b, num_tasks=num_tasks)
    stacked = jax.block_until_ready(stacked)
    assert stacked.shape == (batch, num_tasks, 2)

    ref = reference_forward(x, trunk, head_w, head_b, num_tasks)
    assert jnp.allclose(stacked, ref, atol=1e-2, rtol=1e-2)

    # Per-task list view (PyTorch forward() API).
    preds = mtask_forward_list(x, trunk, head_w, head_b, num_tasks=num_tasks)
    for t, p in enumerate(preds):
        assert p.shape == (batch, 2)
        assert jnp.allclose(p, ref[:, t, :], atol=1e-2, rtol=1e-2)

    print("KERNEL_OK")
</pallas_src>

<mosaic_0001>
module attributes {stable_mosaic.version = 11 : i64} {
  func.func @_mtask_kernel(%arg0: i32, %arg1: memref<8x32xf32, #tpu.memory_space<vmem>>, %arg2: memref<32x32xbf16, #tpu.memory_space<vmem>>, %arg3: memref<1x32xf32, #tpu.memory_space<vmem>>, %arg4: memref<32x32xbf16, #tpu.memory_space<vmem>>, %arg5: memref<1x32xf32, #tpu.memory_space<vmem>>, %arg6: memref<32x128xbf16, #tpu.memory_space<vmem>>, %arg7: memref<1x128xf32, #tpu.memory_space<vmem>>, %arg8: memref<8x128xf32, #tpu.memory_space<vmem>>) attributes {dimension_semantics = [#tpu.dimension_semantics<parallel>], iteration_bounds = array<i64: 1>, scalar_prefetch = 0 : i64, scratch_operands = 0 : i64, tpu.core_type = #tpu.core_type<tc>, window_params = [{transform_indices = @transform_0, window_bounds = array<i64: 8, 32>}, {pipeline_mode = #tpu.pipeline_mode<synchronous>, transform_indices = @transform_1, window_bounds = array<i64: 32, 32>}, {pipeline_mode = #tpu.pipeline_mode<synchronous>, transform_indices = @transform_2, window_bounds = array<i64: 1, 32>}, {pipeline_mode = #tpu.pipeline_mode<synchronous>, transform_indices = @transform_3, window_bounds = array<i64: 32, 32>}, {pipeline_mode = #tpu.pipeline_mode<synchronous>, transform_indices = @transform_4, window_bounds = array<i64: 1, 32>}, {pipeline_mode = #tpu.pipeline_mode<synchronous>, transform_indices = @transform_5, window_bounds = array<i64: 32, 128>}, {pipeline_mode = #tpu.pipeline_mode<synchronous>, transform_indices = @transform_6, window_bounds = array<i64: 1, 128>}, {transform_indices = @transform_7, window_bounds = array<i64: 8, 128>}]} {
    %c0 = arith.constant 0 : index
    %c0_0 = arith.constant 0 : index
    %0 = vector.load %arg1[%c0, %c0_0] : memref<8x32xf32, #tpu.memory_space<vmem>>, vector<8x32xf32>
    %1 = arith.truncf %0 : vector<8x32xf32> to vector<8x32xbf16>
    %c0_1 = arith.constant 0 : index
    %c0_2 = arith.constant 0 : index
    %2 = vector.load %arg2[%c0_1, %c0_2] : memref<32x32xbf16, #tpu.memory_space<vmem>>, vector<32x32xbf16>
    %cst = arith.constant dense<0.000000e+00> : vector<8x32xf32>
    %3 = tpu.matmul %1, %2, %cst {dimension_numbers = #tpu.dot_dimension_numbers<[1], [0], [0], [1], [0, 0, 1, 1], [], []>} : vector<8x32xbf16>, vector<32x32xbf16>, vector<8x32xf32> -> vector<8x32xf32>
    %c0_3 = arith.constant 0 : index
    %c0_4 = arith.constant 0 : index
    %4 = vector.load %arg3[%c0_3, %c0_4] : memref<1x32xf32, #tpu.memory_space<vmem>>, vector<1x32xf32>
    %5 = vector.broadcast %4 : vector<1x32xf32> to vector<8x32xf32>
    %6 = arith.addf %3, %5 : vector<8x32xf32>
    %cst_5 = arith.constant 0.000000e+00 : f32
    %7 = vector.broadcast %cst_5 : f32 to vector<8x32xf32>
    %8 = arith.maximumf %6, %7 : vector<8x32xf32>
    %9 = arith.truncf %8 : vector<8x32xf32> to vector<8x32xbf16>
    %c0_6 = arith.constant 0 : index
    %c0_7 = arith.constant 0 : index
    %10 = vector.load %arg4[%c0_6, %c0_7] : memref<32x32xbf16, #tpu.memory_space<vmem>>, vector<32x32xbf16>
    %cst_8 = arith.constant dense<0.000000e+00> : vector<8x32xf32>
    %11 = tpu.matmul %9, %10, %cst_8 {dimension_numbers = #tpu.dot_dimension_numbers<[1], [0], [0], [1], [0, 0, 1, 1], [], []>} : vector<8x32xbf16>, vector<32x32xbf16>, vector<8x32xf32> -> vector<8x32xf32>
    %c0_9 = arith.constant 0 : index
    %c0_10 = arith.constant 0 : index
    %12 = vector.load %arg5[%c0_9, %c0_10] : memref<1x32xf32, #tpu.memory_space<vmem>>, vector<1x32xf32>
    %13 = vector.broadcast %12 : vector<1x32xf32> to vector<8x32xf32>
    %14 = arith.addf %11, %13 : vector<8x32xf32>
    %cst_11 = arith.constant 0.000000e+00 : f32
    %15 = vector.broadcast %cst_11 : f32 to vector<8x32xf32>
    %16 = arith.maximumf %14, %15 : vector<8x32xf32>
    %17 = arith.truncf %16 : vector<8x32xf32> to vector<8x32xbf16>
    %c0_12 = arith.constant 0 : index
    %c0_13 = arith.constant 0 : index
    %18 = vector.load %arg6[%c0_12, %c0_13] : memref<32x128xbf16, #tpu.memory_space<vmem>>, vector<32x128xbf16>
    %cst_14 = arith.constant dense<0.000000e+00> : vector<8x128xf32>
    %19 = tpu.matmul %17, %18, %cst_14 {dimension_numbers = #tpu.dot_dimension_numbers<[1], [0], [0], [1], [0, 0, 1, 1], [], []>} : vector<8x32xbf16>, vector<32x128xbf16>, vector<8x128xf32> -> vector<8x128xf32>
    %c0_15 = arith.constant 0 : index
    %c0_16 = arith.constant 0 : index
    %20 = vector.load %arg7[%c0_15, %c0_16] : memref<1x128xf32, #tpu.memory_space<vmem>>, vector<1x128xf32>
    %21 = vector.broadcast %20 : vector<1x128xf32> to vector<8x128xf32>
    %22 = arith.addf %19, %21 : vector<8x128xf32>
    %c0_17 = arith.constant 0 : index
    %c0_18 = arith.constant 0 : index
    %23 = vector.load %arg8[%c0_17, %c0_18] : memref<8x128xf32, #tpu.memory_space<vmem>>, vector<8x128xf32>
    tpu.vector_store %arg8[%c0_17, %c0_18], %22 {strides = array<i32>} : memref<8x128xf32, #tpu.memory_space<vmem>>, vector<8x128xf32>,
    return
  }
  func.func @transform_0(%arg0: i32) -> (i32, i32) {
    %c0_i32 = arith.constant 0 : i32
    %c0_i32_0 = arith.constant 0 : i32
    return %arg0, %c0_i32 : i32, i32
  }
  func.func @transform_1(%arg0: i32) -> (i32, i32) {
    %c0_i32 = arith.constant 0 : i32
    %c0_i32_0 = arith.constant 0 : i32
    %c0_i32_1 = arith.constant 0 : i32
    return %c0_i32, %c0_i32_0 : i32, i32
  }
  func.func @transform_2(%arg0: i32) -> (i32, i32) {
    %c0_i32 = arith.constant 0 : i32
    %c0_i32_0 = arith.constant 0 : i32
    %c0_i32_1 = arith.constant 0 : i32
    return %c0_i32, %c0_i32_0 : i32, i32
  }
  func.func @transform_3(%arg0: i32) -> (i32, i32) {
    %c0_i32 = arith.constant 0 : i32
    %c0_i32_0 = arith.constant 0 : i32
    %c0_i32_1 = arith.constant 0 : i32
    return %c0_i32, %c0_i32_0 : i32, i32
  }
  func.func @transform_4(%arg0: i32) -> (i32, i32) {
    %c0_i32 = arith.constant 0 : i32
    %c0_i32_0 = arith.constant 0 : i32
    %c0_i32_1 = arith.constant 0 : i32
    return %c0_i32, %c0_i32_0 : i32, i32
  }
  func.func @transform_5(%arg0: i32) -> (i32, i32) {
    %c0_i32 = arith.constant 0 : i32
    %c0_i32_0 = arith.constant 0 : i32
    %c0_i32_1 = arith.constant 0 : i32
    return %c0_i32, %c0_i32_0 : i32, i32
  }
  func.func @transform_6(%arg0: i32) -> (i32, i32) {
    %c0_i32 = arith.constant 0 : i32
    %c0_i32_0 = arith.constant 0 : i32
    %c0_i32_1 = arith.constant 0 : i32
    return %c0_i32, %c0_i32_0 : i32, i32
  }
  func.func @transform_7(%arg0: i32) -> (i32, i32) {
    %c0_i32 = arith.constant 0 : i32
    %c0_i32_0 = arith.constant 0 : i32
    return %arg0, %c0_i32 : i32, i32
  }
}

</mosaic_0001>

<llo_original>
// kernel: tpu_custom_call.1
$region0: #{tpu_custom_call.1}
  #allocation0 [shape = 'u32[]', space=smem, size = 0x4, offset = 0x4, fixed_abs, tag = 'smem constant byte address 0x4 - core index']
  #allocation1 [shape = 'u32[144,128]{1,0:T(1,128)}', space=vmem, size = 0x12000, scoped, tag = 'internal scratch']
  %s0 = inlined_call_operand.hbm [shape: f32[8,32], index: 0, kind: input, shape index: {}]
  %s1 = inlined_call_operand.hbm [shape: bf16[32,32], index: 1, kind: input, shape index: {}]
  %s2 = inlined_call_operand.vmem [shape: f32[1,32], index: 2, kind: input, shape index: {}]
  %s3 = inlined_call_operand.hbm [shape: bf16[32,32], index: 3, kind: input, shape index: {}]
  %s4 = inlined_call_operand.vmem [shape: f32[1,32], index: 4, kind: input, shape index: {}]
  %s5 = inlined_call_operand.vmem [shape: bf16[32,128], index: 5, kind: input, shape index: {}]
  %s6 = inlined_call_operand.vmem [shape: f32[1,128], index: 6, kind: input, shape index: {}]
  %s7 = inlined_call_operand.hbm [shape: f32[8,128], index: 7, kind: output, shape index: {}]
  %s8 = sld [smem:[#allocation0]]
  $region50: #{tpu_custom_call.1} parent=0
    _
  %s10 = ssub.s32 1, %s8
  %s11 = scalar_select 0, %s10, %s8
  $region1: #{tpu_custom_call.1} parent=0
    #allocation2 [shape = 'u8[4096]{0}', space=vmem, size = 0x1000, scoped, tag = 'input window, operand 0, single buffered']
    #allocation3 [shape = 's32[1]{0}', space=sflag, size = 0x4, scoped, tag = 'scoped memory for tpu_custom_call.1']
    #allocation4 [shape = 's32[1]{0}', space=sflag, size = 0x4, scoped, tag = 'scoped memory for tpu_custom_call.1']
    #allocation5 [shape = 'u8[8192]{0}', space=vmem, size = 0x2000, scoped, tag = 'input window, operand 1, single buffered']
    #allocation6 [shape = 's32[1]{0}', space=sflag, size = 0x4, scoped, tag = 'scoped memory for tpu_custom_call.1']
    #allocation7 [shape = 'u8[8192]{0}', space=vmem, size = 0x2000, scoped, tag = 'input window, operand 3, single buffered']
    #allocation8 [shape = 'u8[4096]{0}', space=vmem, size = 0x1000, scoped, tag = 'output window, operand 0, single buffered']
    %12 = vsyncpa [#allocation3], 0
    %13 = vsyncpa [#allocation6], 0
    %14 = vsyncpa [#allocation4], 0
    // Predicated region
    $region2: #{tpu_custom_call.1} parent=1 // pred_check
      _
    $region3: #{tpu_custom_call.1} parent=1 // pred_check_branch
      %16 = sbr.rel (0) target = $region5
    $region4: #{tpu_custom_call.1} parent=1 // pred_region
      %s18 = ssub.s32 128, 128
      %19 = vsyncadd [#allocation3], %s18
      %s21 = sshll.u32 [#allocation2], 4
      %s22 = int_to_ptr.vmem [resolvable:$true] %s21
      %24 = dma.hbm_to_vmem [thread:$0]  %s0, 128, %s22, [#allocation3]
    $region5: #{tpu_custom_call.1} parent=1 // pred_fallthru
      _
    // Predicated region
    $region6: #{tpu_custom_call.1} parent=1 // pred_check
      _
    $region7: #{tpu_custom_call.1} parent=1 // pred_check_branch
      %26 = sbr.rel (0) target = $region9
    $region8: #{tpu_custom_call.1} parent=1 // pred_region
      %s28 = ssub.s32 256, 256
      %29 = vsyncadd [#allocation6], %s28
      %s30 = sshll.u32 [#allocation5], 4
      %s31 = int_to_ptr.vmem [resolvable:$true] %s30
      %36 = dma.hbm_to_vmem [thread:$0]  %s1, 256, %s31, [#allocation6], 64, 64, 4
    $region9: #{tpu_custom_call.1} parent=1 // pred_fallthru
      _
    // Predicated region
    $region10: #{tpu_custom_call.1} parent=1 // pred_check
      _
    $region11: #{tpu_custom_call.1} parent=1 // pred_check_branch
      %38 = sbr.rel (0) target = $region13
    $region12: #{tpu_custom_call.1} parent=1 // pred_region
      _
    $region13: #{tpu_custom_call.1} parent=1 // pred_fallthru
      _
    // Predicated region
    $region14: #{tpu_custom_call.1} parent=1 // pred_check
      _
    $region15: #{tpu_custom_call.1} parent=1 // pred_check_branch
      %40 = sbr.rel (0) target = $region17
    $region16: #{tpu_custom_call.1} parent=1 // pred_region
      %s42 = ssub.s32 256, 256
      %43 = vsyncadd [#allocation6], %s42
      %s44 = sshll.u32 [#allocation7], 4
      %s45 = int_to_ptr.vmem [resolvable:$true] %s44
      %50 = dma.hbm_to_vmem [thread:$0]  %s3, 256, %s45, [#allocation6], 64, 64, 4
    $region17: #{tpu_custom_call.1} parent=1 // pred_fallthru
      _
    // Predicated region
    $region18: #{tpu_custom_call.1} parent=1 // pred_check
      _
    $region19: #{tpu_custom_call.1} parent=1 // pred_check_branch
      %52 = sbr.rel (0) target = $region21
    $region20: #{tpu_custom_call.1} parent=1 // pred_region
      _
    $region21: #{tpu_custom_call.1} parent=1 // pred_fallthru
      _
    // Predicated region
    $region22: #{tpu_custom_call.1} parent=1 // pred_check
      _
    $region23: #{tpu_custom_call.1} parent=1 // pred_check_branch
      %54 = sbr.rel (0) target = $region25
    $region24: #{tpu_custom_call.1} parent=1 // pred_region
      _
    $region25: #{tpu_custom_call.1} parent=1 // pred_fallthru
      _
    // Predicated region
    $region26: #{tpu_custom_call.1} parent=1 // pred_check
      _
    $region27: #{tpu_custom_call.1} parent=1 // pred_check_branch
      %56 = sbr.rel (0) target = $region29
    $region28: #{tpu_custom_call.1} parent=1 // pred_region
      _
    $region29: #{tpu_custom_call.1} parent=1 // pred_fallthru
      _
    // Predicated region
    $region30: #{tpu_custom_call.1} parent=1 // pred_check
      _
    $region31: #{tpu_custom_call.1} parent=1 // pred_check_branch
      %58 = sbr.rel (0) target = $region33
    $region32: #{tpu_custom_call.1} parent=1 // pred_region
      %59 = dma.done [#allocation3], 128
    $region33: #{tpu_custom_call.1} parent=1 // pred_fallthru
      _
    // Predicated region
    $region34: #{tpu_custom_call.1} parent=1 // pred_check
      _
    $region35: #{tpu_custom_call.1} parent=1 // pred_check_branch
      %61 = sbr.rel (0) target = $region37
    $region36: #{tpu_custom_call.1} parent=1 // pred_region
      %62 = dma.done [#allocation6], 256
    $region37: #{tpu_custom_call.1} parent=1 // pred_fallthru
      _
    // Predicated region
    $region38: #{tpu_custom_call.1} parent=1 // pred_check
      _
    $region39: #{tpu_custom_call.1} parent=1 // pred_check_branch
      %64 = sbr.rel (0) target = $region41
    $region40: #{tpu_custom_call.1} parent=1 // pred_region
      %65 = dma.done [#allocation6], 256
    $region41: #{tpu_custom_call.1} parent=1 // pred_fallthru
      _
    %v67 = vld [vmem:[#allocation2] sm:$0xff]
    %v68 = vpack.c.bf16 %v67, %v67
    %v69 = vld [vmem:[#allocation5] sm:$0xf]
    %v70 = vld [vmem:[#allocation5 + $0x4] sm:$0xf]
    %v71 = vld [vmem:[#allocation5 + $0x8] sm:$0xf]
    %v72 = vld [vmem:[#allocation5 + $0xc] sm:$0xf]
    %v73 = vld [vmem:[%s2] sm:$0x1]
    %v75 = vlaneseq
    %v76 = vshrl.u32 %v75, 7
    %v77 = vsub.s32 0, %v76
    %v78 = vrot.slane %v73, %v77
    %v84 = vunpack.c.l.b16 %v69
    %v85 = vunpack.c.l.b16 %v70
    %v86 = vunpack.c.l.b16 %v71
    %v87 = vunpack.c.l.b16 %v72
    %v88 = vpack.c.b16 %v85, %v84
    %v89 = vpack.c.b16 %v87, %v86
    %vm92 = vcmask 261120
    %v94 = vsel %vm92, %v68, 0
    %96 = vmatprep.subr.bf16.mxu0 0
    %97 = vmatpush1.bf16.msra.mxu0 %v88
    %98 = vmatprep.subr.bf16.mxu0 0
    %99 = vmatpush1.bf16.msra.mxu0 %v89
    %100 = vmatprep.subr.bf16.mxu0 0
    %101 = vmatpush1.bf16.msra.mxu0 0
    %102 = vmatprep.subr.bf16.mxu0 0
    %103 = vmatpush1.bf16.msra.mxu0 0
    %104 = vmatprep.subr.bf16.mxu0 0
    %105 = vmatpush1.bf16.msra.mxu0 0
    %106 = vmatprep.subr.bf16.mxu0 0
    %107 = vmatpush1.bf16.msra.mxu0 0
    %108 = vmatprep.subr.bf16.mxu0 0
    %109 = vmatpush1.bf16.msra.mxu0 0
    %110 = vmatprep.subr.bf16.mxu0 0
    %111 = vmatpush1.bf16.msra.mxu0 0
    %112 = vmatprep.subr.bf16.mxu0 0
    %113 = vmatpush1.bf16.msra.mxu0 0
    %114 = vmatprep.subr.bf16.mxu0 0
    %115 = vmatpush1.bf16.msra.mxu0 0
    %116 = vmatprep.subr.bf16.mxu0 0
    %117 = vmatpush1.bf16.msra.mxu0 0
    %118 = vmatprep.subr.bf16.mxu0 0
    %119 = vmatpush1.bf16.msra.mxu0 0
    %120 = vmatprep.subr.bf16.mxu0 0
    %121 = vmatpush1.bf16.msra.mxu0 0
    %122 = vmatprep.subr.bf16.mxu0 0
    %123 = vmatpush1.bf16.msra.mxu0 0
    %124 = vmatprep.subr.bf16.mxu0 0
    %125 = vmatpush1.bf16.msra.mxu0 0
    %126 = vmatprep.subr.bf16.mxu0 0
    %127 = vmatpush1.bf16.msra.mxu0 0
    %128 = vmatprep.mubr.bf16.mxu0 0
    %129 = vmatmul.mubr.bf16.gmra.mrb[0].mxu0 %v94
    %v130 = vpop.f32.mrb[0].mxu0
    %v131 = vadd.f32 %v78, %v130
    %v132 = vpop.f32.mrb[0].mxu0
    %v133 = vpop.f32.mrb[0].mxu0
    %v134 = vpop.f32.mrb[0].mxu0
    %135 = vdwg.mxu0
    %v136 = vmax.f32 %v131, 0.0
    %v137 = vpack.c.bf16 %v136, %v136
    %v138 = vld [vmem:[#allocation7] sm:$0xf]
    %v139 = vld [vmem:[#allocation7 + $0x4] sm:$0xf]
    %v140 = vld [vmem:[#allocation7 + $0x8] sm:$0xf]
    %v141 = vld [vmem:[#allocation7 + $0xc] sm:$0xf]
    %v142 = vld [vmem:[%s4] sm:$0x1]
    %v144 = vlaneseq
    %v145 = vshrl.u32 %v144, 7
    %v146 = vsub.s32 0, %v145
    %v147 = vrot.slane %v142, %v146
    %v153 = vunpack.c.l.b16 %v138
    %v154 = vunpack.c.l.b16 %v139
    %v155 = vunpack.c.l.b16 %v140
    %v156 = vunpack.c.l.b16 %v141
    %v157 = vpack.c.b16 %v154, %v153
    %v158 = vpack.c.b16 %v156, %v155
    %v162 = vsel %vm92, %v137, 0
    %164 = vmatprep.subr.bf16.mxu0 0
    %165 = vmatpush1.bf16.msra.mxu0 %v157
    %166 = vmatprep.subr.bf16.mxu0 0
    %167 = vmatpush1.bf16.msra.mxu0 %v158
    %168 = vmatprep.subr.bf16.mxu0 0
    %169 = vmatpush1.bf16.msra.mxu0 0
    %170 = vmatprep.subr.bf16.mxu0 0
    %171 = vmatpush1.bf16.msra.mxu0 0
    %172 = vmatprep.subr.bf16.mxu0 0
    %173 = vmatpush1.bf16.msra.mxu0 0
    %174 = vmatprep.subr.bf16.mxu0 0
    %175 = vmatpush1.bf16.msra.mxu0 0
    %176 = vmatprep.subr.bf16.mxu0 0
    %177 = vmatpush1.bf16.msra.mxu0 0
    %178 = vmatprep.subr.bf16.mxu0 0
    %179 = vmatpush1.bf16.msra.mxu0 0
    %180 = vmatprep.subr.bf16.mxu0 0
    %181 = vmatpush1.bf16.msra.mxu0 0
    %182 = vmatprep.subr.bf16.mxu0 0
    %183 = vmatpush1.bf16.msra.mxu0 0
    %184 = vmatprep.subr.bf16.mxu0 0
    %185 = vmatpush1.bf16.msra.mxu0 0
    %186 = vmatprep.subr.bf16.mxu0 0
    %187 = vmatpush1.bf16.msra.mxu0 0
    %188 = vmatprep.subr.bf16.mxu0 0
    %189 = vmatpush1.bf16.msra.mxu0 0
    %190 = vmatprep.subr.bf16.mxu0 0
    %191 = vmatpush1.bf16.msra.mxu0 0
    %192 = vmatprep.subr.bf16.mxu0 0
    %193 = vmatpush1.bf16.msra.mxu0 0
    %194 = vmatprep.subr.bf16.mxu0 0
    %195 = vmatpush1.bf16.msra.mxu0 0
    %196 = vmatprep.mubr.bf16.mxu0 0
    %197 = vmatmul.mubr.bf16.gmra.mrb[0].mxu0 %v162
    %v198 = vpop.f32.mrb[0].mxu0
    %v199 = vadd.f32 %v147, %v198
    %v200 = vpop.f32.mrb[0].mxu0
    %v201 = vpop.f32.mrb[0].mxu0
    %v202 = vpop.f32.mrb[0].mxu0
    %203 = vdwg.mxu0
    %v204 = vmax.f32 %v199, 0.0
    %v205 = vpack.c.bf16 %v204, %v204
    %v206 = vld [vmem:[%s5] sm:$0xf]
    %v207 = vld [vmem:[%s5 + $0x4] sm:$0xf]
    %v208 = vld [vmem:[%s5 + $0x8] sm:$0xf]
    %v209 = vld [vmem:[%s5 + $0xc] sm:$0xf]
    %v210 = vld [vmem:[%s6] sm:$0x1]
    %v212 = vlaneseq
    %v213 = vshrl.u32 %v212, 7
    %v214 = vsub.s32 0, %v213
    %v215 = vrot.slane %v210, %v214
    %v221 = vunpack.c.l.b16 %v206
    %v222 = vunpack.c.l.b16 %v207
    %v223 = vunpack.c.l.b16 %v208
    %v224 = vunpack.c.l.b16 %v209
    %v225 = vpack.c.b16 %v222, %v221
    %v226 = vpack.c.b16 %v224, %v223
    %v230 = vsel %vm92, %v205, 0
    %232 = vmatprep.subr.bf16.mxu0 0
    %233 = vmatpush1.bf16.msra.mxu0 %v225
    %234 = vmatprep.subr.bf16.mxu0 0
    %235 = vmatpush1.bf16.msra.mxu0 %v226
    %236 = vmatprep.subr.bf16.mxu0 0
    %237 = vmatpush1.bf16.msra.mxu0 0
    %238 = vmatprep.subr.bf16.mxu0 0
    %239 = vmatpush1.bf16.msra.mxu0 0
    %240 = vmatprep.subr.bf16.mxu0 0
    %241 = vmatpush1.bf16.msra.mxu0 0
    %242 = vmatprep.subr.bf16.mxu0 0
    %243 = vmatpush1.bf16.msra.mxu0 0
    %244 = vmatprep.subr.bf16.mxu0 0
    %245 = vmatpush1.bf16.msra.mxu0 0
    %246 = vmatprep.subr.bf16.mxu0 0
    %247 = vmatpush1.bf16.msra.mxu0 0
    %248 = vmatprep.subr.bf16.mxu0 0
    %249 = vmatpush1.bf16.msra.mxu0 0
    %250 = vmatprep.subr.bf16.mxu0 0
    %251 = vmatpush1.bf16.msra.mxu0 0
    %252 = vmatprep.subr.bf16.mxu0 0
    %253 = vmatpush1.bf16.msra.mxu0 0
    %254 = vmatprep.subr.bf16.mxu0 0
    %255 = vmatpush1.bf16.msra.mxu0 0
    %256 = vmatprep.subr.bf16.mxu0 0
    %257 = vmatpush1.bf16.msra.mxu0 0
    %258 = vmatprep.subr.bf16.mxu0 0
    %259 = vmatpush1.bf16.msra.mxu0 0
    %260 = vmatprep.subr.bf16.mxu0 0
    %261 = vmatpush1.bf16.msra.mxu0 0
    %262 = vmatprep.subr.bf16.mxu0 0
    %263 = vmatpush1.bf16.msra.mxu0 0
    %264 = vmatprep.mubr.bf16.mxu0 0
    %265 = vmatmul.mubr.bf16.gmra.mrb[0].mxu0 %v230
    %v266 = vpop.f32.mrb[0].mxu0
    %v267 = vadd.f32 %v215, %v266
    %v268 = vpop.f32.mrb[0].mxu0
    %v269 = vpop.f32.mrb[0].mxu0
    %v270 = vpop.f32.mrb[0].mxu0
    %271 = vdwg.mxu0
    %272 = vst [vmem:[#allocation8] sm:$0xff] %v267
    // Predicated region
    $region42: #{tpu_custom_call.1} parent=1 // pred_check
      _
    $region43: #{tpu_custom_call.1} parent=1 // pred_check_branch
      %274 = sbr.rel (0) target = $region45
    $region44: #{tpu_custom_call.1} parent=1 // pred_region
      %s276 = ssub.s32 128, 128
      %277 = vsyncadd [#allocation4], %s276
      %s279 = sshll.u32 [#allocation8], 4
      %s280 = int_to_ptr.vmem [resolvable:$true] %s279
      %282 = dma.vmem_to_hbm [thread:$0]  %s280, 128, %s7, [#allocation4]
    $region45: #{tpu_custom_call.1} parent=1 // pred_fallthru
      _
    // Predicated region
    $region46: #{tpu_custom_call.1} parent=1 // pred_check
      _
    $region47: #{tpu_custom_call.1} parent=1 // pred_check_branch
      %284 = sbr.rel (0) target = $region49
    $region48: #{tpu_custom_call.1} parent=1 // pred_region
      %285 = dma.done [#allocation4], 128
    $region49: #{tpu_custom_call.1} parent=1 // pred_fallthru
      _
    %286 = vsyncpa [#allocation3], 1
    %287 = vsyncpa [#allocation6], 1
    %288 = vsyncpa [#allocation4], 1

</llo_original>
